<compile_context>
chip_gen: v6e
topology: v6e:2x2x1
jax: 0.10.0
libtpu: 0.0.40
codegen_flags: <defaults>
</compile_context>

<pallas_src>
import math

import numpy as np
import jax
import jax.numpy as jnp
from jax.experimental import pallas as pl
from jax.experimental.pallas import tpu as pltpu

# Static architecture constants (Linear(16, 1) forces length-after-pool2 == 1,
# i.e. the input series length is 10).
L_IN = 10
K = 3
C1, C2 = 8, 16
L1 = L_IN - K + 1      # 8  after conv1
L1P = L1 // 2          # 4  after pool1
L2 = L1P - K + 1       # 2  after conv2
L2P = L2 // 2          # 1  after pool2 -> 16 flattened features


def _cnn1d_kernel(x_ref, w1e_ref, w2e_ref, fcw_ref, bias_ref, o_ref):
    # x_ref: (L_IN, B_TILE), batch on lanes.
    x = x_ref[...]

    # conv1 as one MXU matmul (batch fills N): rows r = p*32 + c*4 + j  <->
    # conv1 output position l = 2j + p, channel c.
    h1 = jnp.dot(w1e_ref[...], x, preferred_element_type=jnp.float32)        # (64, BT)

    # MaxPool1d(2): even-position rows vs odd-position rows (aligned sublane blocks).
    h1p = jnp.maximum(h1[0:C1 * L1P, :], h1[C1 * L1P:2 * C1 * L1P, :])       # (32, BT)

    # conv2 as one MXU matmul: rows t = l2*16 + o  <->  conv2 position l2, channel o.
    h2 = jnp.dot(w2e_ref[...], h1p, preferred_element_type=jnp.float32)      # (32, BT)

    # MaxPool1d(2) over the two conv2 positions.
    h2p = jnp.maximum(h2[0:C2, :], h2[C2:2 * C2, :])                          # (16, BT)

    # Linear(16, 1) as a tiny MXU matmul; all biases folded into one scalar.
    out = jnp.dot(fcw_ref[...], h2p, preferred_element_type=jnp.float32)      # (1, BT)
    o_ref[...] = out + bias_ref[0]


def _expand_conv1_weight(w1):
    """(C1,1,K) PyTorch conv1 weight -> (64, L_IN) matrix; row r=(p,c,j) holds the taps
    for conv1 output position l=2j+p of channel c (pool-pair split across halves)."""
    r = np.arange(2 * C1 * L1P)
    p = r // (C1 * L1P)
    c = (r % (C1 * L1P)) // L1P
    j = r % L1P
    l = 2 * j + p
    i = np.arange(L_IN)
    k = i[None, :] - l[:, None]                              # (64, L_IN)
    valid = (k >= 0) & (k < K)
    w1_2d = w1[:, 0, :]                                      # (C1, K)
    vals = w1_2d[c[:, None], np.clip(k, 0, K - 1)]           # (64, L_IN)
    return jnp.where(valid, vals, 0.0).astype(jnp.float32)


def _expand_conv2_weight(w2):
    """(C2,C1,K) conv2 weight -> (32, 32) matrix; row t=(l2,o), col s=(c,j) holds
    w2[o, c, j-l2] when the tap is in range, else 0."""
    t = np.arange(2 * C2)
    l2 = t // C2
    o = t % C2
    s = np.arange(C1 * L1P)
    c = s // L1P
    j = s % L1P
    k = j[None, :] - l2[:, None]                             # (32, 32)
    valid = (k >= 0) & (k < K)
    vals = w2[o[:, None], c[None, :], np.clip(k, 0, K - 1)]  # (32, 32)
    return jnp.where(valid, vals, 0.0).astype(jnp.float32)


def _round_up(x, m):
    return ((x + m - 1) // m) * m


def cnn1d_series_forward(x_ncl, params, b_tile=None):
    """x_ncl: (B, 1, L_IN) float32 in PyTorch NCL layout. Returns (B, 1)."""
    w1, b1, w2, b2, fcw, fcb = params
    B, c_in, L = x_ncl.shape
    assert c_in == 1 and L == L_IN, "CNN_1D_Series requires input shape (B, 1, 10)"

    if b_tile is None:
        # Big tiles amortize per-step pipeline overhead; cap keeps the double-buffered
        # working set (~0.8 KB per lane) comfortably inside scoped VMEM on all chips.
        b_tile = min(_round_up(B, 128), 8192)
    assert b_tile % 128 == 0, "b_tile must be a multiple of 128 (lane width)"

    n_tiles = pl.cdiv(B, b_tile)
    b_pad = n_tiles * b_tile

    # Batch-on-lanes layout, zero-padded to a whole number of tiles.
    x_lb = jnp.transpose(x_ncl[:, 0, :]).astype(jnp.float32)          # (L_IN, B)
    x_lb = jnp.pad(x_lb, ((0, 0), (0, b_pad - B)))                    # (L_IN, b_pad)

    w1e = _expand_conv1_weight(w1)                                    # (64, 10)  VMEM
    w2e = _expand_conv2_weight(w2)                                    # (32, 32)  VMEM
    fcw_v = fcw.astype(jnp.float32).reshape(1, C2)                    # (1, 16)   VMEM

    # Fold conv1/conv2/fc biases into a single output scalar:
    #   - conv biases are constant within each pooled pair (and all conv2 taps are in
    #     range), so they commute past both max-pools;
    #   - they then pass linearly through w2e and fcw.
    b1_col = jnp.repeat(b1.astype(jnp.float32), L1P)                  # (32,)
    conv_bias = (w2e @ b1_col)[:C2] + b2.astype(jnp.float32)          # (16,)
    bias_s = (fcw.astype(jnp.float32).reshape(C2) @ conv_bias
              + fcb.astype(jnp.float32).reshape(())).reshape(1)       # (1,)      SMEM

    out = pl.pallas_call(
        _cnn1d_kernel,
        out_shape=jax.ShapeDtypeStruct((1, b_pad), jnp.float32),
        grid=(n_tiles,),
        in_specs=[
            pl.BlockSpec((L_IN, b_tile), lambda i: (0, i)),            # x tile
            pl.BlockSpec((2 * C1 * L1P, L_IN), lambda i: (0, 0)),      # w1e (resident)
            pl.BlockSpec((2 * C2, C1 * L1P), lambda i: (0, 0)),        # w2e (resident)
            pl.BlockSpec((1, C2), lambda i: (0, 0)),                   # fc weight row
            pl.BlockSpec(memory_space=pltpu.MemorySpace.SMEM),         # folded bias
        ],
        out_specs=pl.BlockSpec((1, b_tile), lambda i: (0, i)),         # lane-dense slab
        compiler_params=pltpu.CompilerParams(
            dimension_semantics=("parallel",)),
    )(x_lb, w1e, w2e, fcw_v, bias_s)

    return out[0, :B].reshape(B, 1)


def ref_forward(x, w1, b1, w2, b2, fcw, fcb):
    """Pure-JAX reference matching the PyTorch forward (NCL layout)."""
    def conv1d(x, w, b):
        k = w.shape[2]
        lout = x.shape[2] - k + 1
        out = jnp.zeros((x.shape[0], w.shape[0], lout), jnp.float32)
        for kk in range(k):
            out = out + jnp.einsum('bcl,oc->bol', x[:, :, kk:kk + lout], w[:, :, kk])
        return out + b[None, :, None]

    def maxpool2(x):
        lo = x.shape[2] // 2
        return jnp.maximum(x[:, :, 0:2 * lo:2], x[:, :, 1:2 * lo:2])

    h = maxpool2(conv1d(x, w1, b1))
    h = maxpool2(conv1d(h, w2, b2))
    h = h.reshape(h.shape[0], -1)
    return h @ fcw.T + fcb[None, :]


if __name__ == "__main__":
    B = 256          # small demo batch; single grid step at the auto-chosen tile
    key = jax.random.PRNGKey(0)
    ks = jax.random.split(key, 7)

    def uinit(k, shape, fan_in):
        bound = 1.0 / math.sqrt(fan_in)
        return jax.random.uniform(k, shape, jnp.float32, -bound, bound)

    # PyTorch-convention parameter shapes, deterministic init
    w1 = uinit(ks[0], (C1, 1, K), 1 * K)      # conv1.weight
    b1 = uinit(ks[1], (C1,), 1 * K)           # conv1.bias
    w2 = uinit(ks[2], (C2, C1, K), C1 * K)    # conv2.weight
    b2 = uinit(ks[3], (C2,), C1 * K)          # conv2.bias
    fcw = uinit(ks[4], (1, C2), C2)           # fc.weight
    fcb = uinit(ks[5], (1,), C2)              # fc.bias
    x = jax.random.normal(ks[6], (B, 1, L_IN), jnp.float32)

    params = (w1, b1, w2, b2, fcw, fcb)

    y = cnn1d_series_forward(x, params)
    y = jax.block_until_ready(y)

    y_ref = ref_forward(x, *params)
    assert y.shape == (B, 1), y.shape
    assert jnp.allclose(y, y_ref, atol=1e-4, rtol=1e-4), (
        "max abs err", float(jnp.max(jnp.abs(y - y_ref))))

    print("KERNEL_OK")
</pallas_src>

<mosaic_0001>
module attributes {stable_mosaic.version = 11 : i64} {
  func.func @_cnn1d_kernel(%arg0: i32, %arg1: memref<10x256xf32, #tpu.memory_space<vmem>>, %arg2: memref<64x10xf32, #tpu.memory_space<vmem>>, %arg3: memref<32x32xf32, #tpu.memory_space<vmem>>, %arg4: memref<1x16xf32, #tpu.memory_space<vmem>>, %arg5: memref<1xf32, #tpu.memory_space<smem>>, %arg6: memref<1x256xf32, #tpu.memory_space<vmem>>) attributes {dimension_semantics = [#tpu.dimension_semantics<parallel>], iteration_bounds = array<i64: 1>, scalar_prefetch = 0 : i64, scratch_operands = 0 : i64, tpu.core_type = #tpu.core_type<tc>, window_params = [{transform_indices = @transform_0, window_bounds = array<i64: 10, 256>}, {pipeline_mode = #tpu.pipeline_mode<synchronous>, transform_indices = @transform_1, window_bounds = array<i64: 64, 10>}, {pipeline_mode = #tpu.pipeline_mode<synchronous>, transform_indices = @transform_2, window_bounds = array<i64: 32, 32>}, {pipeline_mode = #tpu.pipeline_mode<synchronous>, transform_indices = @transform_3, window_bounds = array<i64: 1, 16>}, {transform_indices = @transform_4, window_bounds = array<i64: 1>}, {transform_indices = @transform_5, window_bounds = array<i64: 1, 256>}]} {
    %c0 = arith.constant 0 : index
    %c0_0 = arith.constant 0 : index
    %0 = vector.load %arg1[%c0, %c0_0] : memref<10x256xf32, #tpu.memory_space<vmem>>, vector<10x256xf32>
    %c0_1 = arith.constant 0 : index
    %c0_2 = arith.constant 0 : index
    %1 = vector.load %arg2[%c0_1, %c0_2] : memref<64x10xf32, #tpu.memory_space<vmem>>, vector<64x10xf32>
    %cst = arith.constant dense<0.000000e+00> : vector<64x256xf32>
    %2 = tpu.matmul %1, %0, %cst {dimension_numbers = #tpu.dot_dimension_numbers<[1], [0], [0], [1], [0, 0, 1, 1], [], []>} : vector<64x10xf32>, vector<10x256xf32>, vector<64x256xf32> -> vector<64x256xf32>
    %3 = vector.extract_strided_slice %2 {offsets = [0, 0], sizes = [32, 256], strides = [1, 1]} : vector<64x256xf32> to vector<32x256xf32>
    %4 = vector.extract_strided_slice %2 {offsets = [32, 0], sizes = [32, 256], strides = [1, 1]} : vector<64x256xf32> to vector<32x256xf32>
    %5 = arith.maximumf %3, %4 : vector<32x256xf32>
    %c0_3 = arith.constant 0 : index
    %c0_4 = arith.constant 0 : index
    %6 = vector.load %arg3[%c0_3, %c0_4] : memref<32x32xf32, #tpu.memory_space<vmem>>, vector<32x32xf32>
    %cst_5 = arith.constant dense<0.000000e+00> : vector<32x256xf32>
    %7 = tpu.matmul %6, %5, %cst_5 {dimension_numbers = #tpu.dot_dimension_numbers<[1], [0], [0], [1], [0, 0, 1, 1], [], []>} : vector<32x32xf32>, vector<32x256xf32>, vector<32x256xf32> -> vector<32x256xf32>
    %8 = vector.extract_strided_slice %7 {offsets = [0, 0], sizes = [16, 256], strides = [1, 1]} : vector<32x256xf32> to vector<16x256xf32>
    %9 = vector.extract_strided_slice %7 {offsets = [16, 0], sizes = [16, 256], strides = [1, 1]} : vector<32x256xf32> to vector<16x256xf32>
    %10 = arith.maximumf %8, %9 : vector<16x256xf32>
    %c0_6 = arith.constant 0 : index
    %c0_7 = arith.constant 0 : index
    %11 = vector.load %arg4[%c0_6, %c0_7] : memref<1x16xf32, #tpu.memory_space<vmem>>, vector<1x16xf32>
    %cst_8 = arith.constant dense<0.000000e+00> : vector<1x256xf32>
    %12 = tpu.matmul %11, %10, %cst_8 {dimension_numbers = #tpu.dot_dimension_numbers<[1], [0], [0], [1], [0, 0, 1, 1], [], []>} : vector<1x16xf32>, vector<16x256xf32>, vector<1x256xf32> -> vector<1x256xf32>
    %c0_9 = arith.constant 0 : index
    %13 = memref.load %arg5[%c0_9] : memref<1xf32, #tpu.memory_space<smem>>
    %14 = vector.broadcast %13 : f32 to vector<1x256xf32>
    %15 = arith.addf %12, %14 : vector<1x256xf32>
    %c0_10 = arith.constant 0 : index
    %c0_11 = arith.constant 0 : index
    %16 = vector.load %arg6[%c0_10, %c0_11] : memref<1x256xf32, #tpu.memory_space<vmem>>, vector<1x256xf32>
    tpu.vector_store %arg6[%c0_10, %c0_11], %15 {strides = array<i32>} : memref<1x256xf32, #tpu.memory_space<vmem>>, vector<1x256xf32>,
    return
  }
  func.func @transform_0(%arg0: i32) -> (i32, i32) {
    %c0_i32 = arith.constant 0 : i32
    %c0_i32_0 = arith.constant 0 : i32
    return %c0_i32, %arg0 : i32, i32
  }
  func.func @transform_1(%arg0: i32) -> (i32, i32) {
    %c0_i32 = arith.constant 0 : i32
    %c0_i32_0 = arith.constant 0 : i32
    %c0_i32_1 = arith.constant 0 : i32
    return %c0_i32, %c0_i32_0 : i32, i32
  }
  func.func @transform_2(%arg0: i32) -> (i32, i32) {
    %c0_i32 = arith.constant 0 : i32
    %c0_i32_0 = arith.constant 0 : i32
    %c0_i32_1 = arith.constant 0 : i32
    return %c0_i32, %c0_i32_0 : i32, i32
  }
  func.func @transform_3(%arg0: i32) -> (i32, i32) {
    %c0_i32 = arith.constant 0 : i32
    %c0_i32_0 = arith.constant 0 : i32
    %c0_i32_1 = arith.constant 0 : i32
    return %c0_i32, %c0_i32_0 : i32, i32
  }
  func.func @transform_4(%arg0: i32) -> i32 {
    %c0_i32 = arith.constant 0 : i32
    %c0_i32_0 = arith.constant 0 : i32
    return %c0_i32 : i32
  }
  func.func @transform_5(%arg0: i32) -> (i32, i32) {
    %c0_i32 = arith.constant 0 : i32
    %c0_i32_0 = arith.constant 0 : i32
    return %c0_i32, %arg0 : i32, i32
  }
}

</mosaic_0001>

<llo_original>
// kernel: tpu_custom_call.1
$region0: #{tpu_custom_call.1}
  #allocation0 [shape = 'u32[]', space=smem, size = 0x4, offset = 0x4, fixed_abs, tag = 'smem constant byte address 0x4 - core index']
  #allocation1 [shape = 'u32[144,128]{1,0:T(1,128)}', space=vmem, size = 0x12000, scoped, tag = 'internal scratch']
  #allocation2 [shape = 'f32[1]{0:T(128)S(6)}', space=smem, size = 0x200, scoped, tag = 'scoped memory for tpu_custom_call.1']
  %s0 = inlined_call_operand.vmem [shape: f32[10,256], index: 0, kind: input, shape index: {}]
  %s1 = inlined_call_operand.vmem [shape: f32[64,10], index: 1, kind: input, shape index: {}]
  %s2 = inlined_call_operand.vmem [shape: f32[32,32], index: 2, kind: input, shape index: {}]
  %s3 = inlined_call_operand.vmem [shape: f32[1,16], index: 3, kind: input, shape index: {}]
  %s4 = inlined_call_operand.<no memory space> [shape: f32[1], index: 4, kind: input, shape index: {}]
  %s5 = inlined_call_operand.hbm [shape: f32[1,256], index: 5, kind: output, shape index: {}]
  %s6 = sld [smem:[#allocation0]]
  $region30: #{tpu_custom_call.1} parent=0
    _
  %s8 = ssub.s32 1, %s6
  %s9 = scalar_select 0, %s8, %s6
  %10 = sst [smem:[#allocation2]] %s4
  $region1: #{tpu_custom_call.1} parent=0
    #allocation3 [shape = 'u8[1024]{0}', space=vmem, size = 0x400, scoped, tag = 'output window, operand 0, single buffered']
    #allocation4 [shape = 's32[1]{0}', space=sflag, size = 0x4, scoped, tag = 'scoped memory for tpu_custom_call.1']
    %11 = vsyncpa [#allocation4], 0
    // Predicated region
    $region2: #{tpu_custom_call.1} parent=1 // pred_check
      _
    $region3: #{tpu_custom_call.1} parent=1 // pred_check_branch
      %13 = sbr.rel (0) target = $region5
    $region4: #{tpu_custom_call.1} parent=1 // pred_region
      _
    $region5: #{tpu_custom_call.1} parent=1 // pred_fallthru
      _
    // Predicated region
    $region6: #{tpu_custom_call.1} parent=1 // pred_check
      _
    $region7: #{tpu_custom_call.1} parent=1 // pred_check_branch
      %15 = sbr.rel (0) target = $region9
    $region8: #{tpu_custom_call.1} parent=1 // pred_region
      _
    $region9: #{tpu_custom_call.1} parent=1 // pred_fallthru
      _
    // Predicated region
    $region10: #{tpu_custom_call.1} parent=1 // pred_check
      _
    $region11: #{tpu_custom_call.1} parent=1 // pred_check_branch
      %17 = sbr.rel (0) target = $region13
    $region12: #{tpu_custom_call.1} parent=1 // pred_region
      _
    $region13: #{tpu_custom_call.1} parent=1 // pred_fallthru
      _
    // Predicated region
    $region14: #{tpu_custom_call.1} parent=1 // pred_check
      _
    $region15: #{tpu_custom_call.1} parent=1 // pred_check_branch
      %19 = sbr.rel (0) target = $region17
    $region16: #{tpu_custom_call.1} parent=1 // pred_region
      _
    $region17: #{tpu_custom_call.1} parent=1 // pred_fallthru
      _
    // Predicated region
    $region18: #{tpu_custom_call.1} parent=1 // pred_check
      _
    $region19: #{tpu_custom_call.1} parent=1 // pred_check_branch
      %21 = sbr.rel (0) target = $region21
    $region20: #{tpu_custom_call.1} parent=1 // pred_region
      _
    $region21: #{tpu_custom_call.1} parent=1 // pred_fallthru
      _
    %v22 = vld [vmem:[%s0] sm:$0xff]
    %v23 = vld [vmem:[%s0 + $0x8] sm:$0xff]
    %v24 = vld [vmem:[%s0 + $0x10] sm:$0x3]
    %v25 = vld [vmem:[%s0 + $0x18] sm:$0x3]
    %v26 = vld [vmem:[%s1] sm:$0xff]
    %v27 = vld [vmem:[%s1 + $0x8] sm:$0xff]
    %v28 = vld [vmem:[%s1 + $0x10] sm:$0xff]
    %v29 = vld [vmem:[%s1 + $0x18] sm:$0xff]
    %v30 = vld [vmem:[%s1 + $0x20] sm:$0xff]
    %v31 = vld [vmem:[%s1 + $0x28] sm:$0xff]
    %v32 = vld [vmem:[%s1 + $0x30] sm:$0xff]
    %v33 = vld [vmem:[%s1 + $0x38] sm:$0xff]
    %vm34 = vcmask 80896
    %v36 = vsel %vm34, %v26, 0
    %v39 = vsel %vm34, %v27, 0
    %v42 = vsel %vm34, %v28, 0
    %v45 = vsel %vm34, %v29, 0
    %v48 = vsel %vm34, %v30, 0
    %v51 = vsel %vm34, %v31, 0
    %v54 = vsel %vm34, %v32, 0
    %v57 = vsel %vm34, %v33, 0
    %vm59 = vcmask 1041408
    %v61 = vsel %vm59, %v24, 0
    %v64 = vsel %vm59, %v25, 0
    %66 = vmatprep.subr.mxu0 0.0
    %67 = vmatpush1.msra.mxu0 0.0
    %68 = vmatprep.subr.mxu0 0.0
    %69 = vmatpush1.msra.mxu0 0.0
    %70 = vmatprep.subr.mxu0 0.0
    %71 = vmatpush1.msra.mxu0 0.0
    %72 = vmatprep.subr.mxu0 0.0
    %73 = vmatpush1.msra.mxu0 0.0
    %74 = vmatprep.subr.mxu0 0.0
    %75 = vmatpush1.msra.mxu0 0.0
    %76 = vmatprep.subr.mxu0 0.0
    %77 = vmatpush1.msra.mxu0 0.0
    %78 = vmatprep.subr.mxu0 0.0
    %79 = vmatpush1.msra.mxu0 0.0
    %80 = vmatprep.subr.mxu0 0.0
    %81 = vmatpush1.msra.mxu0 0.0
    %82 = vmatprep.subr.mxu0 0.0
    %83 = vmatpush1.msra.mxu0 0.0
    %84 = vmatprep.subr.mxu0 0.0
    %85 = vmatpush1.msra.mxu0 0.0
    %86 = vmatprep.subr.mxu0 0.0
    %87 = vmatpush1.msra.mxu0 0.0
    %88 = vmatprep.subr.mxu0 0.0
    %89 = vmatpush1.msra.mxu0 0.0
    %90 = vmatprep.subr.mxu0 0.0
    %91 = vmatpush1.msra.mxu0 0.0
    %92 = vmatprep.subr.mxu0 0.0
    %93 = vmatpush1.msra.mxu0 0.0
    %94 = vmatprep.subr.mxu0 %v64
    %95 = vmatpush1.msra.mxu0 %v61
    %96 = vmatprep.subr.mxu0 %v23
    %97 = vmatpush1.msra.mxu0 %v22
    %98 = vmatprep.subr.mxu0 0.0
    %99 = vmatpush2.msra.mxu0 0.0
    %100 = vmatprep.subr.mxu0 0.0
    %101 = vmatpush2.msra.mxu0 0.0
    %102 = vmatprep.subr.mxu0 0.0
    %103 = vmatpush2.msra.mxu0 0.0
    %104 = vmatprep.subr.mxu0 0.0
    %105 = vmatpush2.msra.mxu0 0.0
    %106 = vmatprep.subr.mxu0 0.0
    %107 = vmatpush2.msra.mxu0 0.0
    %108 = vmatprep.subr.mxu0 0.0
    %109 = vmatpush2.msra.mxu0 0.0
    %110 = vmatprep.subr.mxu0 0.0
    %111 = vmatpush2.msra.mxu0 0.0
    %112 = vmatprep.subr.mxu0 0.0
    %113 = vmatpush2.msra.mxu0 0.0
    %114 = vmatprep.subr.mxu0 0.0
    %115 = vmatpush2.msra.mxu0 0.0
    %116 = vmatprep.subr.mxu0 0.0
    %117 = vmatpush2.msra.mxu0 0.0
    %118 = vmatprep.subr.mxu0 0.0
    %119 = vmatpush2.msra.mxu0 0.0
    %120 = vmatprep.subr.mxu0 0.0
    %121 = vmatpush2.msra.mxu0 0.0
    %122 = vmatprep.subr.mxu0 0.0
    %123 = vmatpush2.msra.mxu0 0.0
    %124 = vmatprep.subr.mxu0 0.0
    %125 = vmatpush2.msra.mxu0 0.0
    %126 = vmatprep.subr.mxu0 0.0
    %127 = vmatpush2.msra.mxu0 0.0
    %128 = vmatprep.subr.mxu0 0.0
    %129 = vmatpush2.msra.mxu0 0.0
    %130 = vmatprep.mubr.f32.mxu0 0.0
    %131 = vmatmul.mubr.f32.gmra.mxu0 %v36
    %v132 = vpop.f32.mrf.mxu0
    %v133 = vadd.f32 0.0, %v132
    %v134 = vpop.f32.mrf.mxu0
    %v135 = vadd.f32 0.0, %v134
    %136 = vmatprep.mubr.f32.mxu0 0.0
    %137 = vmatmul.mubr.f32.gmra.mxu0 %v39
    %v138 = vpop.f32.mrf.mxu0
    %v139 = vadd.f32 0.0, %v138
    %v140 = vpop.f32.mrf.mxu0
    %v141 = vadd.f32 0.0, %v140
    %142 = vmatprep.mubr.f32.mxu0 0.0
    %143 = vmatmul.mubr.f32.gmra.mxu0 %v42
    %v144 = vpop.f32.mrf.mxu0
    %v145 = vadd.f32 0.0, %v144
    %v146 = vpop.f32.mrf.mxu0
    %v147 = vadd.f32 0.0, %v146
    %148 = vmatprep.mubr.f32.mxu0 0.0
    %149 = vmatmul.mubr.f32.gmra.mxu0 %v45
    %v150 = vpop.f32.mrf.mxu0
    %v151 = vadd.f32 0.0, %v150
    %v152 = vpop.f32.mrf.mxu0
    %v153 = vadd.f32 0.0, %v152
    %154 = vmatprep.mubr.f32.mxu0 0.0
    %155 = vmatmul.mubr.f32.gmra.mxu0 %v48
    %v156 = vpop.f32.mrf.mxu0
    %v157 = vadd.f32 0.0, %v156
    %v158 = vpop.f32.mrf.mxu0
    %v159 = vadd.f32 0.0, %v158
    %160 = vmatprep.mubr.f32.mxu0 0.0
    %161 = vmatmul.mubr.f32.gmra.mxu0 %v51
    %v162 = vpop.f32.mrf.mxu0
    %v163 = vadd.f32 0.0, %v162
    %v164 = vpop.f32.mrf.mxu0
    %v165 = vadd.f32 0.0, %v164
    %166 = vmatprep.mubr.f32.mxu0 0.0
    %167 = vmatmul.mubr.f32.gmra.mxu0 %v54
    %v168 = vpop.f32.mrf.mxu0
    %v169 = vadd.f32 0.0, %v168
    %v170 = vpop.f32.mrf.mxu0
    %v171 = vadd.f32 0.0, %v170
    %172 = vmatprep.mubr.f32.mxu0 0.0
    %173 = vmatmul.mubr.f32.gmra.mxu0 %v57
    %v174 = vpop.f32.mrf.mxu0
    %v175 = vadd.f32 0.0, %v174
    %v176 = vpop.f32.mrf.mxu0
    %v177 = vadd.f32 0.0, %v176
    %178 = vdwg.mxu0
    %v179 = vmax.f32 %v133, %v157
    %v180 = vmax.f32 %v135, %v159
    %v181 = vmax.f32 %v139, %v163
    %v182 = vmax.f32 %v141, %v165
    %v183 = vmax.f32 %v145, %v169
    %v184 = vmax.f32 %v147, %v171
    %v185 = vmax.f32 %v151, %v175
    %v186 = vmax.f32 %v153, %v177
    %v187 = vld [vmem:[%s2] sm:$0xff]
    %v188 = vld [vmem:[%s2 + $0x8] sm:$0xff]
    %v189 = vld [vmem:[%s2 + $0x10] sm:$0xff]
    %v190 = vld [vmem:[%s2 + $0x18] sm:$0xff]
    %vm191 = vcmask 261120
    %v193 = vsel %vm191, %v187, 0
    %v196 = vsel %vm191, %v188, 0
    %v199 = vsel %vm191, %v189, 0
    %v202 = vsel %vm191, %v190, 0
    %204 = vmatprep.subr.mxu0 0.0
    %205 = vmatpush1.msra.mxu0 0.0
    %206 = vmatprep.subr.mxu0 0.0
    %207 = vmatpush1.msra.mxu0 0.0
    %208 = vmatprep.subr.mxu0 0.0
    %209 = vmatpush1.msra.mxu0 0.0
    %210 = vmatprep.subr.mxu0 0.0
    %211 = vmatpush1.msra.mxu0 0.0
    %212 = vmatprep.subr.mxu0 0.0
    %213 = vmatpush1.msra.mxu0 0.0
    %214 = vmatprep.subr.mxu0 0.0
    %215 = vmatpush1.msra.mxu0 0.0
    %216 = vmatprep.subr.mxu0 0.0
    %217 = vmatpush1.msra.mxu0 0.0
    %218 = vmatprep.subr.mxu0 0.0
    %219 = vmatpush1.msra.mxu0 0.0
    %220 = vmatprep.subr.mxu0 0.0
    %221 = vmatpush1.msra.mxu0 0.0
    %222 = vmatprep.subr.mxu0 0.0
    %223 = vmatpush1.msra.mxu0 0.0
    %224 = vmatprep.subr.mxu0 0.0
    %225 = vmatpush1.msra.mxu0 0.0
    %226 = vmatprep.subr.mxu0 0.0
    %227 = vmatpush1.msra.mxu0 0.0
    %228 = vmatprep.subr.mxu0 %v186
    %229 = vmatpush1.msra.mxu0 %v185
    %230 = vmatprep.subr.mxu0 %v184
    %231 = vmatpush1.msra.mxu0 %v183
    %232 = vmatprep.subr.mxu0 %v182
    %233 = vmatpush1.msra.mxu0 %v181
    %234 = vmatprep.subr.mxu0 %v180
    %235 = vmatpush1.msra.mxu0 %v179
    %236 = vmatprep.subr.mxu0 0.0
    %237 = vmatpush2.msra.mxu0 0.0
    %238 = vmatprep.subr.mxu0 0.0
    %239 = vmatpush2.msra.mxu0 0.0
    %240 = vmatprep.subr.mxu0 0.0
    %241 = vmatpush2.msra.mxu0 0.0
    %242 = vmatprep.subr.mxu0 0.0
    %243 = vmatpush2.msra.mxu0 0.0
    %244 = vmatprep.subr.mxu0 0.0
    %245 = vmatpush2.msra.mxu0 0.0
    %246 = vmatprep.subr.mxu0 0.0
    %247 = vmatpush2.msra.mxu0 0.0
    %248 = vmatprep.subr.mxu0 0.0
    %249 = vmatpush2.msra.mxu0 0.0
    %250 = vmatprep.subr.mxu0 0.0
    %251 = vmatpush2.msra.mxu0 0.0
    %252 = vmatprep.subr.mxu0 0.0
    %253 = vmatpush2.msra.mxu0 0.0
    %254 = vmatprep.subr.mxu0 0.0
    %255 = vmatpush2.msra.mxu0 0.0
    %256 = vmatprep.subr.mxu0 0.0
    %257 = vmatpush2.msra.mxu0 0.0
    %258 = vmatprep.subr.mxu0 0.0
    %259 = vmatpush2.msra.mxu0 0.0
    %260 = vmatprep.subr.mxu0 0.0
    %261 = vmatpush2.msra.mxu0 0.0
    %262 = vmatprep.subr.mxu0 0.0
    %263 = vmatpush2.msra.mxu0 0.0
    %264 = vmatprep.subr.mxu0 0.0
    %265 = vmatpush2.msra.mxu0 0.0
    %266 = vmatprep.subr.mxu0 0.0
    %267 = vmatpush2.msra.mxu0 0.0
    %268 = vmatprep.mubr.f32.mxu0 0.0
    %269 = vmatmul.mubr.f32.gmra.mxu0 %v193
    %v270 = vpop.f32.mrf.mxu0
    %v271 = vadd.f32 0.0, %v270
    %v272 = vpop.f32.mrf.mxu0
    %v273 = vadd.f32 0.0, %v272
    %274 = vmatprep.mubr.f32.mxu0 0.0
    %275 = vmatmul.mubr.f32.gmra.mxu0 %v196
    %v276 = vpop.f32.mrf.mxu0
    %v277 = vadd.f32 0.0, %v276
    %v278 = vpop.f32.mrf.mxu0
    %v279 = vadd.f32 0.0, %v278
    %280 = vmatprep.mubr.f32.mxu0 0.0
    %281 = vmatmul.mubr.f32.gmra.mxu0 %v199
    %v282 = vpop.f32.mrf.mxu0
    %v283 = vadd.f32 0.0, %v282
    %v284 = vpop.f32.mrf.mxu0
    %v285 = vadd.f32 0.0, %v284
    %286 = vmatprep.mubr.f32.mxu0 0.0
    %287 = vmatmul.mubr.f32.gmra.mxu0 %v202
    %v288 = vpop.f32.mrf.mxu0
    %v289 = vadd.f32 0.0, %v288
    %v290 = vpop.f32.mrf.mxu0
    %v291 = vadd.f32 0.0, %v290
    %292 = vdwg.mxu0
    %v293 = vmax.f32 %v271, %v283
    %v294 = vmax.f32 %v273, %v285
    %v295 = vmax.f32 %v277, %v289
    %v296 = vmax.f32 %v279, %v291
    %v297 = vld [vmem:[%s3] sm:$0x1]
    %s298 = sld [smem:[#allocation2]]
    %v299 = vstv %s298
    %vm300 = vcmask 130048
    %v302 = vsel %vm300, %v297, 0
    %304 = vmatprep.subr.mxu0 0.0
    %305 = vmatpush1.msra.mxu0 0.0
    %306 = vmatprep.subr.mxu0 0.0
    %307 = vmatpush1.msra.mxu0 0.0
    %308 = vmatprep.subr.mxu0 0.0
    %309 = vmatpush1.msra.mxu0 0.0
    %310 = vmatprep.subr.mxu0 0.0
    %311 = vmatpush1.msra.mxu0 0.0
    %312 = vmatprep.subr.mxu0 0.0
    %313 = vmatpush1.msra.mxu0 0.0
    %314 = vmatprep.subr.mxu0 0.0
    %315 = vmatpush1.msra.mxu0 0.0
    %316 = vmatprep.subr.mxu0 0.0
    %317 = vmatpush1.msra.mxu0 0.0
    %318 = vmatprep.subr.mxu0 0.0
    %319 = vmatpush1.msra.mxu0 0.0
    %320 = vmatprep.subr.mxu0 0.0
    %321 = vmatpush1.msra.mxu0 0.0
    %322 = vmatprep.subr.mxu0 0.0
    %323 = vmatpush1.msra.mxu0 0.0
    %324 = vmatprep.subr.mxu0 0.0
    %325 = vmatpush1.msra.mxu0 0.0
    %326 = vmatprep.subr.mxu0 0.0
    %327 = vmatpush1.msra.mxu0 0.0
    %328 = vmatprep.subr.mxu0 0.0
    %329 = vmatpush1.msra.mxu0 0.0
    %330 = vmatprep.subr.mxu0 0.0
    %331 = vmatpush1.msra.mxu0 0.0
    %332 = vmatprep.subr.mxu0 %v296
    %333 = vmatpush1.msra.mxu0 %v295
    %334 = vmatprep.subr.mxu0 %v294
    %335 = vmatpush1.msra.mxu0 %v293
    %336 = vmatprep.subr.mxu0 0.0
    %337 = vmatpush2.msra.mxu0 0.0
    %338 = vmatprep.subr.mxu0 0.0
    %339 = vmatpush2.msra.mxu0 0.0
    %340 = vmatprep.subr.mxu0 0.0
    %341 = vmatpush2.msra.mxu0 0.0
    %342 = vmatprep.subr.mxu0 0.0
    %343 = vmatpush2.msra.mxu0 0.0
    %344 = vmatprep.subr.mxu0 0.0
    %345 = vmatpush2.msra.mxu0 0.0
    %346 = vmatprep.subr.mxu0 0.0
    %347 = vmatpush2.msra.mxu0 0.0
    %348 = vmatprep.subr.mxu0 0.0
    %349 = vmatpush2.msra.mxu0 0.0
    %350 = vmatprep.subr.mxu0 0.0
    %351 = vmatpush2.msra.mxu0 0.0
    %352 = vmatprep.subr.mxu0 0.0
    %353 = vmatpush2.msra.mxu0 0.0
    %354 = vmatprep.subr.mxu0 0.0
    %355 = vmatpush2.msra.mxu0 0.0
    %356 = vmatprep.subr.mxu0 0.0
    %357 = vmatpush2.msra.mxu0 0.0
    %358 = vmatprep.subr.mxu0 0.0
    %359 = vmatpush2.msra.mxu0 0.0
    %360 = vmatprep.subr.mxu0 0.0
    %361 = vmatpush2.msra.mxu0 0.0
    %362 = vmatprep.subr.mxu0 0.0
    %363 = vmatpush2.msra.mxu0 0.0
    %364 = vmatprep.subr.mxu0 0.0
    %365 = vmatpush2.msra.mxu0 0.0
    %366 = vmatprep.subr.mxu0 0.0
    %367 = vmatpush2.msra.mxu0 0.0
    %368 = vmatprep.mubr.f32.mxu0 0.0
    %369 = vmatmul.mubr.f32.gmra.mxu0 %v302
    %v370 = vpop.f32.mrf.mxu0
    %v371 = vadd.f32 %v299, %v370
    %v372 = vpop.f32.mrf.mxu0
    %v373 = vadd.f32 %v299, %v372
    %374 = vdwg.mxu0
    %v377 = vcombine.low %v371, %v373
    %v379 = vunpack.c.l.s4 1966171168
    %v380 = vunpack.c.0.s8 %v379
    %v381 = vlaneseq
    %v382 = vshrl.u32 %v381, 7
    %v383 = vsub.s32 %v380, %v382
    %v384 = vrot.slane %v377, %v383
    %v386 = vunpack.c.l.s4 1966171168
    %v387 = vunpack.c.0.s8 %v386
    %v388 = vlaneseq
    %v389 = vshrl.u32 %v388, 7
    %v390 = vsub.s32 %v387, %v389
    %v391 = vrot.slane %v384, %v390
    %v393 = vlaneseq
    %vm394 = vcmp.ge.s32.totalorder %v393, 0
    %vm395 = vcmp.lt.s32.totalorder %v393, 256
    %vm396 = vmand %vm394, %vm395
    %397 = vst.msk [vmem:[#allocation3] sm:$0x3] %vm396, %v391
    // Predicated region
    $region22: #{tpu_custom_call.1} parent=1 // pred_check
      _
    $region23: #{tpu_custom_call.1} parent=1 // pred_check_branch
      %399 = sbr.rel (0) target = $region25
    $region24: #{tpu_custom_call.1} parent=1 // pred_region
      %s401 = ssub.s32 32, 32
      %402 = vsyncadd [#allocation4], %s401
      %s404 = sshll.u32 [#allocation3], 4
      %s405 = int_to_ptr.vmem [resolvable:$true] %s404
      %407 = dma.vmem_to_hbm [thread:$0]  %s405, 32, %s5, [#allocation4]
    $region25: #{tpu_custom_call.1} parent=1 // pred_fallthru
      _
    // Predicated region
    $region26: #{tpu_custom_call.1} parent=1 // pred_check
      _
    $region27: #{tpu_custom_call.1} parent=1 // pred_check_branch
      %409 = sbr.rel (0) target = $region29
    $region28: #{tpu_custom_call.1} parent=1 // pred_region
      %410 = dma.done [#allocation4], 32
    $region29: #{tpu_custom_call.1} parent=1 // pred_fallthru
      _
    %411 = vsyncpa [#allocation4], 1

</llo_original>
